<compile_context>
chip_gen: v7x
topology: tpu7x:2x2x1
jax: 0.10.0
libtpu: 0.0.40
codegen_flags: <defaults>
</compile_context>

<pallas_src>
from functools import partial

import jax
import jax.numpy as jnp
from jax.experimental import pallas as pl
from jax.experimental.pallas import tpu as pltpu

EPS = 1e-5


def _mlp_kernel(x_ref, w1_ref, w2_ref, w3_ref, w4_ref, vec_ref, o_ref):
    d1 = w1_ref.shape[1]          # 64
    d2 = w2_ref.shape[1]          # 128
    d3 = w3_ref.shape[1]          # 256
    d4 = w4_ref.shape[1]          # lane-padded output width (multiple of 128)
    n_out = o_ref.shape[1]        # real output width
    inv_n = 1.0 / x_ref.shape[0]  # static batch size

    def dot_bf16(h, w_ref):
        # bf16 x bf16 MXU matmul, f32 accumulation.
        return jnp.dot(h.astype(jnp.bfloat16), w_ref[...],
                       preferred_element_type=jnp.float32)

    def bn_relu(h, g, be):
        # Training-mode BatchNorm1d (biased variance), folded affine:
        # both reductions depend only on h (overlap on the XLU); the wide
        # (batch, d) path is a single fused mul+add+max.
        s = jnp.sum(h, axis=0, keepdims=True)
        sq = jnp.sum(h * h, axis=0, keepdims=True)
        mean = s * inv_n
        var = jnp.maximum(sq * inv_n - mean * mean, 0.0)
        scale = g * jax.lax.rsqrt(var + EPS)      # (1, d)
        shift = be - mean * scale                 # (1, d)
        return jnp.maximum(h * scale + shift, 0.0)

    h = x_ref[...].astype(jnp.float32)

    # Layer 1 (bias cancelled by BN mean subtraction)
    h = dot_bf16(h, w1_ref)
    h = bn_relu(h, vec_ref[0:1, 0:d1], vec_ref[1:2, 0:d1])

    # Layer 2
    h = dot_bf16(h, w2_ref)
    h = bn_relu(h, vec_ref[2:3, 0:d2], vec_ref[3:4, 0:d2])

    # Layer 3
    h = dot_bf16(h, w3_ref)
    h = bn_relu(h, vec_ref[4:5, 0:d3], vec_ref[5:6, 0:d3])

    # Layer 4 (bias kept; no BN after it), then tanh on the real lanes only and
    # a direct (batch, output_size) store.
    h = dot_bf16(h, w4_ref) + vec_ref[6:7, 0:d4]
    o_ref[...] = jnp.tanh(h[:, 0:n_out])


@partial(jax.jit, static_argnames=("output_size",))
def model_g_forward(x, params, output_size):
    """x: (batch, input_size) f32. params: packed dict from init_params."""
    batch, in_dim = x.shape
    out_pad = params["w4"].shape[1]

    flops = 2 * batch * (in_dim * 64 + 64 * 128 + 128 * 256 + 256 * out_pad)
    transcendentals = 3 * (64 + 128 + 256) + batch * output_size
    bytes_accessed = (
        x.size * 4
        + 2 * (params["w1"].size + params["w2"].size
               + params["w3"].size + params["w4"].size)   # bf16 weights
        + params["vec"].size * 4
        + batch * output_size * 4
    )

    vmem = pl.BlockSpec(memory_space=pltpu.MemorySpace.VMEM)
    return pl.pallas_call(
        _mlp_kernel,
        out_shape=jax.ShapeDtypeStruct((batch, output_size), jnp.float32),
        in_specs=[vmem] * 6,
        out_specs=vmem,
        cost_estimate=pl.CostEstimate(
            flops=flops,
            transcendentals=transcendentals,
            bytes_accessed=bytes_accessed,
        ),
    )(x, params["w1"], params["w2"], params["w3"], params["w4"], params["vec"])


def init_params(key, input_size, output_size):
    """Deterministic init. Linear weights stored (in, out) = W^T of PyTorch.

    Packed layout:
      w1 (in,64), w2 (64,128), w3 (128,256)   -- bf16, natural shapes
      w4 (256, out_pad)                        -- bf16, zero lane-padded
      vec (8, >=256) f32: rows = [g1, be1, g2, be2, g3, be3, b4, 0]
    b1/b2/b3 are intentionally not materialized (cancelled by train-mode BN).
    """
    dims = [(input_size, 64), (64, 128), (128, 256), (256, output_size)]
    keys = jax.random.split(key, 2 * len(dims) + 6)
    ws, bs = [], []
    for i, (din, dout) in enumerate(dims):
        bound = float(1.0 / (din ** 0.5))
        ws.append(jax.random.uniform(keys[2 * i], (din, dout),
                                     minval=-bound, maxval=bound, dtype=jnp.float32))
        bs.append(jax.random.uniform(keys[2 * i + 1], (dout,),
                                     minval=-bound, maxval=bound, dtype=jnp.float32))

    out_pad = -(-output_size // 128) * 128          # round up to lane multiple
    vw = max(256, out_pad)                           # vector-slab lane width

    w4p = jnp.zeros((256, out_pad), jnp.float32).at[:, :output_size].set(ws[3])
    b4p = jnp.zeros((out_pad,), jnp.float32).at[:output_size].set(bs[3])

    def row(v):
        return jnp.zeros((vw,), jnp.float32).at[: v.shape[0]].set(v)

    # Non-trivial (but deterministic) BN affine params to exercise the kernel.
    bn_dims = (64, 128, 256)
    gammas = [jax.random.uniform(keys[8 + j], (d,), minval=0.5, maxval=1.5,
                                 dtype=jnp.float32) for j, d in enumerate(bn_dims)]
    betas = [jax.random.uniform(keys[11 + j], (d,), minval=-0.5, maxval=0.5,
                                dtype=jnp.float32) for j, d in enumerate(bn_dims)]

    vec = jnp.stack([
        row(gammas[0]), row(betas[0]),
        row(gammas[1]), row(betas[1]),
        row(gammas[2]), row(betas[2]),
        row(b4p), jnp.zeros((vw,), jnp.float32),
    ])

    return {
        "w1": ws[0].astype(jnp.bfloat16),
        "w2": ws[1].astype(jnp.bfloat16),
        "w3": ws[2].astype(jnp.bfloat16),
        "w4": w4p.astype(jnp.bfloat16),
        "vec": vec,
    }


def _reference(x, params, output_size):
    """Pure-JAX reference: same bf16-weight dots, standard two-pass train-mode
    BN in f32 (independent of the kernel's single-pass/folded formulation)."""
    def bn_relu(h, g, be):
        mean = jnp.mean(h, axis=0, keepdims=True)
        var = jnp.mean((h - mean) ** 2, axis=0, keepdims=True)
        return jnp.maximum((h - mean) / jnp.sqrt(var + EPS) * g + be, 0.0)

    def dot_bf16(h, w):
        return jnp.dot(h.astype(jnp.bfloat16), w, preferred_element_type=jnp.float32)

    vec = params["vec"]
    h = dot_bf16(x, params["w1"])
    h = bn_relu(h, vec[0, :64], vec[1, :64])
    h = dot_bf16(h, params["w2"])
    h = bn_relu(h, vec[2, :128], vec[3, :128])
    h = dot_bf16(h, params["w3"])
    h = bn_relu(h, vec[4, :256], vec[5, :256])
    h = dot_bf16(h, params["w4"]) + vec[6, : params["w4"].shape[1]]
    return jnp.tanh(h)[:, :output_size]


if __name__ == "__main__":
    INPUT_SIZE = 32
    OUTPUT_SIZE = 16
    BATCH = 8

    key = jax.random.PRNGKey(0)
    k_x, k_p = jax.random.split(key)
    x = jax.random.normal(k_x, (BATCH, INPUT_SIZE), dtype=jnp.float32)
    params = init_params(k_p, INPUT_SIZE, OUTPUT_SIZE)

    out = model_g_forward(x, params, OUTPUT_SIZE)
    out = jax.block_until_ready(out)
    assert out.shape == (BATCH, OUTPUT_SIZE)

    ref = _reference(x, params, OUTPUT_SIZE)
    # bf16-weight matmuls + single-pass BN stats => slightly relaxed tolerance
    # vs. the pure-f32, two-pass reference formulation.
    assert jnp.allclose(out, ref, atol=2e-3, rtol=2e-3), (
        float(jnp.max(jnp.abs(out - ref))))
    print("KERNEL_OK")
</pallas_src>

<mosaic_0001>
module attributes {stable_mosaic.version = 11 : i64} {
  func.func @_mlp_kernel(%arg0: memref<8x32xf32, #tpu.memory_space<vmem>>, %arg1: memref<32x64xbf16, #tpu.memory_space<vmem>>, %arg2: memref<64x128xbf16, #tpu.memory_space<vmem>>, %arg3: memref<128x256xbf16, #tpu.memory_space<vmem>>, %arg4: memref<256x128xbf16, #tpu.memory_space<vmem>>, %arg5: memref<8x256xf32, #tpu.memory_space<vmem>>, %arg6: memref<8x16xf32, #tpu.memory_space<vmem>>) attributes {dimension_semantics = [], scalar_prefetch = 0 : i64, scratch_operands = 0 : i64, tpu.core_type = #tpu.core_type<tc>} {
    %c0 = arith.constant 0 : index
    %c0_0 = arith.constant 0 : index
    %0 = vector.load %arg0[%c0, %c0_0] : memref<8x32xf32, #tpu.memory_space<vmem>>, vector<8x32xf32>
    %1 = arith.truncf %0 : vector<8x32xf32> to vector<8x32xbf16>
    %c0_1 = arith.constant 0 : index
    %c0_2 = arith.constant 0 : index
    %2 = vector.load %arg1[%c0_1, %c0_2] : memref<32x64xbf16, #tpu.memory_space<vmem>>, vector<32x64xbf16>
    %cst = arith.constant dense<0.000000e+00> : vector<8x64xf32>
    %3 = tpu.matmul %1, %2, %cst {dimension_numbers = #tpu.dot_dimension_numbers<[1], [0], [0], [1], [0, 0, 1, 1], [], []>} : vector<8x32xbf16>, vector<32x64xbf16>, vector<8x64xf32> -> vector<8x64xf32>
    %c0_3 = arith.constant 0 : index
    %c0_4 = arith.constant 0 : index
    %4 = vector.load %arg5[%c0_3, %c0_4] : memref<8x256xf32, #tpu.memory_space<vmem>>, vector<1x64xf32>
    %c1 = arith.constant 1 : index
    %c0_5 = arith.constant 0 : index
    %5 = vector.load %arg5[%c1, %c0_5] : memref<8x256xf32, #tpu.memory_space<vmem>>, vector<1x64xf32>
    %cst_6 = arith.constant dense<0.000000e+00> : vector<64xf32>
    %6 = vector.multi_reduction <add>, %3, %cst_6 [0] : vector<8x64xf32> to vector<64xf32>
    %7 = vector.shape_cast %6 : vector<64xf32> to vector<1x64xf32>
    %8 = arith.mulf %3, %3 : vector<8x64xf32>
    %cst_7 = arith.constant dense<0.000000e+00> : vector<64xf32>
    %9 = vector.multi_reduction <add>, %8, %cst_7 [0] : vector<8x64xf32> to vector<64xf32>
    %10 = vector.shape_cast %9 : vector<64xf32> to vector<1x64xf32>
    %cst_8 = arith.constant 1.250000e-01 : f32
    %11 = vector.broadcast %cst_8 : f32 to vector<1x64xf32>
    %12 = arith.mulf %7, %11 : vector<1x64xf32>
    %cst_9 = arith.constant 1.250000e-01 : f32
    %13 = vector.broadcast %cst_9 : f32 to vector<1x64xf32>
    %14 = arith.mulf %10, %13 : vector<1x64xf32>
    %15 = arith.mulf %12, %12 : vector<1x64xf32>
    %16 = arith.subf %14, %15 : vector<1x64xf32>
    %cst_10 = arith.constant 0.000000e+00 : f32
    %17 = vector.broadcast %cst_10 : f32 to vector<1x64xf32>
    %18 = arith.maximumf %16, %17 : vector<1x64xf32>
    %cst_11 = arith.constant 9.99999974E-6 : f32
    %19 = vector.broadcast %cst_11 : f32 to vector<1x64xf32>
    %20 = arith.addf %18, %19 : vector<1x64xf32>
    %21 = math.rsqrt %20 : vector<1x64xf32>
    %22 = arith.mulf %4, %21 : vector<1x64xf32>
    %23 = arith.mulf %12, %22 : vector<1x64xf32>
    %24 = arith.subf %5, %23 : vector<1x64xf32>
    %25 = vector.broadcast %22 : vector<1x64xf32> to vector<8x64xf32>
    %26 = arith.mulf %3, %25 : vector<8x64xf32>
    %27 = vector.broadcast %24 : vector<1x64xf32> to vector<8x64xf32>
    %28 = arith.addf %26, %27 : vector<8x64xf32>
    %cst_12 = arith.constant 0.000000e+00 : f32
    %29 = vector.broadcast %cst_12 : f32 to vector<8x64xf32>
    %30 = arith.maximumf %28, %29 : vector<8x64xf32>
    %31 = arith.truncf %30 : vector<8x64xf32> to vector<8x64xbf16>
    %c0_13 = arith.constant 0 : index
    %c0_14 = arith.constant 0 : index
    %32 = vector.load %arg2[%c0_13, %c0_14] : memref<64x128xbf16, #tpu.memory_space<vmem>>, vector<64x128xbf16>
    %cst_15 = arith.constant dense<0.000000e+00> : vector<8x128xf32>
    %33 = tpu.matmul %31, %32, %cst_15 {dimension_numbers = #tpu.dot_dimension_numbers<[1], [0], [0], [1], [0, 0, 1, 1], [], []>} : vector<8x64xbf16>, vector<64x128xbf16>, vector<8x128xf32> -> vector<8x128xf32>
    %c2 = arith.constant 2 : index
    %c0_16 = arith.constant 0 : index
    %34 = vector.load %arg5[%c2, %c0_16] : memref<8x256xf32, #tpu.memory_space<vmem>>, vector<1x128xf32>
    %c3 = arith.constant 3 : index
    %c0_17 = arith.constant 0 : index
    %35 = vector.load %arg5[%c3, %c0_17] : memref<8x256xf32, #tpu.memory_space<vmem>>, vector<1x128xf32>
    %cst_18 = arith.constant dense<0.000000e+00> : vector<128xf32>
    %36 = vector.multi_reduction <add>, %33, %cst_18 [0] : vector<8x128xf32> to vector<128xf32>
    %37 = vector.shape_cast %36 : vector<128xf32> to vector<1x128xf32>
    %38 = arith.mulf %33, %33 : vector<8x128xf32>
    %cst_19 = arith.constant dense<0.000000e+00> : vector<128xf32>
    %39 = vector.multi_reduction <add>, %38, %cst_19 [0] : vector<8x128xf32> to vector<128xf32>
    %40 = vector.shape_cast %39 : vector<128xf32> to vector<1x128xf32>
    %cst_20 = arith.constant 1.250000e-01 : f32
    %41 = vector.broadcast %cst_20 : f32 to vector<1x128xf32>
    %42 = arith.mulf %37, %41 : vector<1x128xf32>
    %cst_21 = arith.constant 1.250000e-01 : f32
    %43 = vector.broadcast %cst_21 : f32 to vector<1x128xf32>
    %44 = arith.mulf %40, %43 : vector<1x128xf32>
    %45 = arith.mulf %42, %42 : vector<1x128xf32>
    %46 = arith.subf %44, %45 : vector<1x128xf32>
    %cst_22 = arith.constant 0.000000e+00 : f32
    %47 = vector.broadcast %cst_22 : f32 to vector<1x128xf32>
    %48 = arith.maximumf %46, %47 : vector<1x128xf32>
    %cst_23 = arith.constant 9.99999974E-6 : f32
    %49 = vector.broadcast %cst_23 : f32 to vector<1x128xf32>
    %50 = arith.addf %48, %49 : vector<1x128xf32>
    %51 = math.rsqrt %50 : vector<1x128xf32>
    %52 = arith.mulf %34, %51 : vector<1x128xf32>
    %53 = arith.mulf %42, %52 : vector<1x128xf32>
    %54 = arith.subf %35, %53 : vector<1x128xf32>
    %55 = vector.broadcast %52 : vector<1x128xf32> to vector<8x128xf32>
    %56 = arith.mulf %33, %55 : vector<8x128xf32>
    %57 = vector.broadcast %54 : vector<1x128xf32> to vector<8x128xf32>
    %58 = arith.addf %56, %57 : vector<8x128xf32>
    %cst_24 = arith.constant 0.000000e+00 : f32
    %59 = vector.broadcast %cst_24 : f32 to vector<8x128xf32>
    %60 = arith.maximumf %58, %59 : vector<8x128xf32>
    %61 = arith.truncf %60 : vector<8x128xf32> to vector<8x128xbf16>
    %c0_25 = arith.constant 0 : index
    %c0_26 = arith.constant 0 : index
    %62 = vector.load %arg3[%c0_25, %c0_26] : memref<128x256xbf16, #tpu.memory_space<vmem>>, vector<128x256xbf16>
    %cst_27 = arith.constant dense<0.000000e+00> : vector<8x256xf32>
    %63 = tpu.matmul %61, %62, %cst_27 {dimension_numbers = #tpu.dot_dimension_numbers<[1], [0], [0], [1], [0, 0, 1, 1], [], []>} : vector<8x128xbf16>, vector<128x256xbf16>, vector<8x256xf32> -> vector<8x256xf32>
    %c4 = arith.constant 4 : index
    %c0_28 = arith.constant 0 : index
    %64 = vector.load %arg5[%c4, %c0_28] : memref<8x256xf32, #tpu.memory_space<vmem>>, vector<1x256xf32>
    %c5 = arith.constant 5 : index
    %c0_29 = arith.constant 0 : index
    %65 = vector.load %arg5[%c5, %c0_29] : memref<8x256xf32, #tpu.memory_space<vmem>>, vector<1x256xf32>
    %cst_30 = arith.constant dense<0.000000e+00> : vector<256xf32>
    %66 = vector.multi_reduction <add>, %63, %cst_30 [0] : vector<8x256xf32> to vector<256xf32>
    %67 = vector.shape_cast %66 : vector<256xf32> to vector<1x256xf32>
    %68 = arith.mulf %63, %63 : vector<8x256xf32>
    %cst_31 = arith.constant dense<0.000000e+00> : vector<256xf32>
    %69 = vector.multi_reduction <add>, %68, %cst_31 [0] : vector<8x256xf32> to vector<256xf32>
    %70 = vector.shape_cast %69 : vector<256xf32> to vector<1x256xf32>
    %cst_32 = arith.constant 1.250000e-01 : f32
    %71 = vector.broadcast %cst_32 : f32 to vector<1x256xf32>
    %72 = arith.mulf %67, %71 : vector<1x256xf32>
    %cst_33 = arith.constant 1.250000e-01 : f32
    %73 = vector.broadcast %cst_33 : f32 to vector<1x256xf32>
    %74 = arith.mulf %70, %73 : vector<1x256xf32>
    %75 = arith.mulf %72, %72 : vector<1x256xf32>
    %76 = arith.subf %74, %75 : vector<1x256xf32>
    %cst_34 = arith.constant 0.000000e+00 : f32
    %77 = vector.broadcast %cst_34 : f32 to vector<1x256xf32>
    %78 = arith.maximumf %76, %77 : vector<1x256xf32>
    %cst_35 = arith.constant 9.99999974E-6 : f32
    %79 = vector.broadcast %cst_35 : f32 to vector<1x256xf32>
    %80 = arith.addf %78, %79 : vector<1x256xf32>
    %81 = math.rsqrt %80 : vector<1x256xf32>
    %82 = arith.mulf %64, %81 : vector<1x256xf32>
    %83 = arith.mulf %72, %82 : vector<1x256xf32>
    %84 = arith.subf %65, %83 : vector<1x256xf32>
    %85 = vector.broadcast %82 : vector<1x256xf32> to vector<8x256xf32>
    %86 = arith.mulf %63, %85 : vector<8x256xf32>
    %87 = vector.broadcast %84 : vector<1x256xf32> to vector<8x256xf32>
    %88 = arith.addf %86, %87 : vector<8x256xf32>
    %cst_36 = arith.constant 0.000000e+00 : f32
    %89 = vector.broadcast %cst_36 : f32 to vector<8x256xf32>
    %90 = arith.maximumf %88, %89 : vector<8x256xf32>
    %91 = arith.truncf %90 : vector<8x256xf32> to vector<8x256xbf16>
    %c0_37 = arith.constant 0 : index
    %c0_38 = arith.constant 0 : index
    %92 = vector.load %arg4[%c0_37, %c0_38] : memref<256x128xbf16, #tpu.memory_space<vmem>>, vector<256x128xbf16>
    %cst_39 = arith.constant dense<0.000000e+00> : vector<8x128xf32>
    %93 = tpu.matmul %91, %92, %cst_39 {dimension_numbers = #tpu.dot_dimension_numbers<[1], [0], [0], [1], [0, 0, 1, 1], [], []>} : vector<8x256xbf16>, vector<256x128xbf16>, vector<8x128xf32> -> vector<8x128xf32>
    %c6 = arith.constant 6 : index
    %c0_40 = arith.constant 0 : index
    %94 = vector.load %arg5[%c6, %c0_40] : memref<8x256xf32, #tpu.memory_space<vmem>>, vector<1x128xf32>
    %95 = vector.broadcast %94 : vector<1x128xf32> to vector<8x128xf32>
    %96 = arith.addf %93, %95 : vector<8x128xf32>
    %97 = vector.extract_strided_slice %96 {offsets = [0, 0], sizes = [8, 16], strides = [1, 1]} : vector<8x128xf32> to vector<8x16xf32>
    %98 = math.tanh %97 : vector<8x16xf32>
    %c0_41 = arith.constant 0 : index
    %c0_42 = arith.constant 0 : index
    %99 = vector.load %arg6[%c0_41, %c0_42] : memref<8x16xf32, #tpu.memory_space<vmem>>, vector<8x16xf32>
    tpu.vector_store %arg6[%c0_41, %c0_42], %98 {strides = array<i32>} : memref<8x16xf32, #tpu.memory_space<vmem>>, vector<8x16xf32>,
    return
  }
}

</mosaic_0001>

<llo_original>
// kernel: model_g_forward.1
$region0: #{model_g_forward.1}
  #allocation0 [shape = 'u32[]', space=smem, size = 0x4, offset = 0x4, fixed_abs, tag = 'smem constant byte address 0x4 - core index']
  #allocation1 [shape = 'u32[144,128]{1,0:T(1,128)}', space=vmem, size = 0x12000, scoped, tag = 'internal scratch']
  %s0 = inlined_call_operand.hbm [shape: f32[8,32], index: 0, kind: input, shape index: {}]
  %s1 = inlined_call_operand.hbm [shape: bf16[32,64], index: 1, kind: input, shape index: {}]
  %s2 = inlined_call_operand.hbm [shape: bf16[64,128], index: 2, kind: input, shape index: {}]
  %s3 = inlined_call_operand.hbm [shape: bf16[128,256], index: 3, kind: input, shape index: {}]
  %s4 = inlined_call_operand.hbm [shape: bf16[256,128], index: 4, kind: input, shape index: {}]
  %s5 = inlined_call_operand.hbm [shape: f32[8,256], index: 5, kind: input, shape index: {}]
  %s6 = inlined_call_operand.hbm [shape: f32[8,16], index: 6, kind: output, shape index: {}]
  %s7 = sld [smem:[#allocation0]]
  $region58: #{model_g_forward.1} parent=0
    _
  %s9 = ssub.s32 1, %s7
  %s10 = scalar_select 0, %s9, %s7
  $region1: #{model_g_forward.1} parent=0
    #allocation2 [shape = 'u8[4096]{0}', space=vmem, size = 0x1000, scoped, tag = 'input window, operand 0, single buffered']
    #allocation3 [shape = 's32[1]{0}', space=sflag, size = 0x4, scoped, tag = 'scoped memory for model_g_forward.1']
    #allocation4 [shape = 's32[1]{0}', space=sflag, size = 0x4, scoped, tag = 'scoped memory for model_g_forward.1']
    #allocation5 [shape = 'u8[8192]{0}', space=vmem, size = 0x2000, scoped, tag = 'input window, operand 1, single buffered']
    #allocation6 [shape = 's32[1]{0}', space=sflag, size = 0x4, scoped, tag = 'scoped memory for model_g_forward.1']
    #allocation7 [shape = 'u8[16384]{0}', space=vmem, size = 0x4000, scoped, tag = 'input window, operand 2, single buffered']
    #allocation8 [shape = 'u8[65536]{0}', space=vmem, size = 0x10000, scoped, tag = 'input window, operand 3, single buffered']
    #allocation9 [shape = 's32[1]{0}', space=sflag, size = 0x4, scoped, tag = 'scoped memory for model_g_forward.1']
    #allocation10 [shape = 'u8[65536]{0}', space=vmem, size = 0x10000, scoped, tag = 'input window, operand 4, single buffered']
    #allocation11 [shape = 'u8[8192]{0}', space=vmem, size = 0x2000, scoped, tag = 'input window, operand 5, single buffered']
    #allocation12 [shape = 's32[1]{0}', space=sflag, size = 0x4, scoped, tag = 'scoped memory for model_g_forward.1']
    #allocation13 [shape = 'u8[4096]{0}', space=vmem, size = 0x1000, scoped, tag = 'output window, operand 0, single buffered']
    %11 = vsyncpa [#allocation3], 0
    %12 = vsyncpa [#allocation6], 0
    %13 = vsyncpa [#allocation9], 0
    %14 = vsyncpa [#allocation12], 0
    %15 = vsyncpa [#allocation4], 0
    // Predicated region
    $region2: #{model_g_forward.1} parent=1 // pred_check
      _
    $region3: #{model_g_forward.1} parent=1 // pred_check_branch
      %17 = sbr.rel (0) target = $region5
    $region4: #{model_g_forward.1} parent=1 // pred_region
      %s19 = ssub.s32 128, 128
      %20 = vsyncadd [#allocation3], %s19
      %s22 = sshll.u32 [#allocation2], 4
      %s23 = int_to_ptr.vmem [resolvable:$true] %s22
      %25 = dma.hbm_to_vmem [thread:$0]  %s0, 128, %s23, [#allocation3]
    $region5: #{model_g_forward.1} parent=1 // pred_fallthru
      _
    // Predicated region
    $region6: #{model_g_forward.1} parent=1 // pred_check
      _
    $region7: #{model_g_forward.1} parent=1 // pred_check_branch
      %27 = sbr.rel (0) target = $region9
    $region8: #{model_g_forward.1} parent=1 // pred_region
      %s29 = ssub.s32 256, 256
      %30 = vsyncadd [#allocation6], %s29
      %s31 = sshll.u32 [#allocation5], 4
      %s32 = int_to_ptr.vmem [resolvable:$true] %s31
      %37 = dma.hbm_to_vmem [thread:$0]  %s1, 256, %s32, [#allocation6], 64, 64, 4
    $region9: #{model_g_forward.1} parent=1 // pred_fallthru
      _
    // Predicated region
    $region10: #{model_g_forward.1} parent=1 // pred_check
      _
    $region11: #{model_g_forward.1} parent=1 // pred_check_branch
      %39 = sbr.rel (0) target = $region13
    $region12: #{model_g_forward.1} parent=1 // pred_region
      %s41 = ssub.s32 512, 512
      %42 = vsyncadd [#allocation6], %s41
      %s43 = sshll.u32 [#allocation7], 4
      %s44 = int_to_ptr.vmem [resolvable:$true] %s43
      %49 = dma.hbm_to_vmem [thread:$0]  %s2, 512, %s44, [#allocation6], 64, 64, 4
    $region13: #{model_g_forward.1} parent=1 // pred_fallthru
      _
    // Predicated region
    $region14: #{model_g_forward.1} parent=1 // pred_check
      _
    $region15: #{model_g_forward.1} parent=1 // pred_check_branch
      %51 = sbr.rel (0) target = $region17
    $region16: #{model_g_forward.1} parent=1 // pred_region
      %s53 = ssub.s32 2048, 2048
      %54 = vsyncadd [#allocation9], %s53
      %s55 = sshll.u32 [#allocation8], 4
      %s56 = int_to_ptr.vmem [resolvable:$true] %s55
      %61 = dma.hbm_to_vmem [thread:$0]  %s3, 2048, %s56, [#allocation9], 128, 128, 8
    $region17: #{model_g_forward.1} parent=1 // pred_fallthru
      _
    // Predicated region
    $region18: #{model_g_forward.1} parent=1 // pred_check
      _
    $region19: #{model_g_forward.1} parent=1 // pred_check_branch
      %63 = sbr.rel (0) target = $region21
    $region20: #{model_g_forward.1} parent=1 // pred_region
      %s65 = ssub.s32 2048, 2048
      %66 = vsyncadd [#allocation9], %s65
      %s67 = sshll.u32 [#allocation10], 4
      %s68 = int_to_ptr.vmem [resolvable:$true] %s67
      %73 = dma.hbm_to_vmem [thread:$0]  %s4, 2048, %s68, [#allocation9], 64, 64, 4
    $region21: #{model_g_forward.1} parent=1 // pred_fallthru
      _
    // Predicated region
    $region22: #{model_g_forward.1} parent=1 // pred_check
      _
    $region23: #{model_g_forward.1} parent=1 // pred_check_branch
      %75 = sbr.rel (0) target = $region25
    $region24: #{model_g_forward.1} parent=1 // pred_region
      %s77 = ssub.s32 256, 256
      %78 = vsyncadd [#allocation12], %s77
      %s80 = sshll.u32 [#allocation11], 4
      %s81 = int_to_ptr.vmem [resolvable:$true] %s80
      %83 = dma.hbm_to_vmem [thread:$0]  %s5, 256, %s81, [#allocation12]
    $region25: #{model_g_forward.1} parent=1 // pred_fallthru
      _
    // Predicated region
    $region26: #{model_g_forward.1} parent=1 // pred_check
      _
    $region27: #{model_g_forward.1} parent=1 // pred_check_branch
      %85 = sbr.rel (0) target = $region29
    $region28: #{model_g_forward.1} parent=1 // pred_region
      %86 = dma.done [#allocation3], 128
    $region29: #{model_g_forward.1} parent=1 // pred_fallthru
      _
    // Predicated region
    $region30: #{model_g_forward.1} parent=1 // pred_check
      _
    $region31: #{model_g_forward.1} parent=1 // pred_check_branch
      %88 = sbr.rel (0) target = $region33
    $region32: #{model_g_forward.1} parent=1 // pred_region
      %89 = dma.done [#allocation6], 256
    $region33: #{model_g_forward.1} parent=1 // pred_fallthru
      _
    // Predicated region
    $region34: #{model_g_forward.1} parent=1 // pred_check
      _
    $region35: #{model_g_forward.1} parent=1 // pred_check_branch
      %91 = sbr.rel (0) target = $region37
    $region36: #{model_g_forward.1} parent=1 // pred_region
      %92 = dma.done [#allocation6], 512
    $region37: #{model_g_forward.1} parent=1 // pred_fallthru
      _
    // Predicated region
    $region38: #{model_g_forward.1} parent=1 // pred_check
      _
    $region39: #{model_g_forward.1} parent=1 // pred_check_branch
      %94 = sbr.rel (0) target = $region41
    $region40: #{model_g_forward.1} parent=1 // pred_region
      %95 = dma.done [#allocation9], 2048
    $region41: #{model_g_forward.1} parent=1 // pred_fallthru
      _
    // Predicated region
    $region42: #{model_g_forward.1} parent=1 // pred_check
      _
    $region43: #{model_g_forward.1} parent=1 // pred_check_branch
      %97 = sbr.rel (0) target = $region45
    $region44: #{model_g_forward.1} parent=1 // pred_region
      %98 = dma.done [#allocation9], 2048
    $region45: #{model_g_forward.1} parent=1 // pred_fallthru
      _
    // Predicated region
    $region46: #{model_g_forward.1} parent=1 // pred_check
      _
    $region47: #{model_g_forward.1} parent=1 // pred_check_branch
      %100 = sbr.rel (0) target = $region49
    $region48: #{model_g_forward.1} parent=1 // pred_region
      %101 = dma.done [#allocation12], 256
    $region49: #{model_g_forward.1} parent=1 // pred_fallthru
      _
    %v103 = vld [vmem:[#allocation2] sm:$0xff]
    %v104 = vpack.c.bf16 %v103, %v103
    %v105 = vld [vmem:[#allocation5] sm:$0xf]
    %v106 = vld [vmem:[#allocation5 + $0x4] sm:$0xf]
    %v107 = vld [vmem:[#allocation5 + $0x8] sm:$0xf]
    %v108 = vld [vmem:[#allocation5 + $0xc] sm:$0xf]
    %v113 = vunpack.c.l.b16 %v105
    %v114 = vunpack.c.l.b16 %v106
    %v115 = vunpack.c.l.b16 %v107
    %v116 = vunpack.c.l.b16 %v108
    %v117 = vpack.c.b16 %v114, %v113
    %v118 = vpack.c.b16 %v116, %v115
    %vm121 = vcmask 261120
    %v123 = vsel %vm121, %v104, 0
    %125 = vmatprep.subr.bf16.mxu0 0
    %126 = vmatpush1.bf16.msra.mxu0 %v117
    %127 = vmatprep.subr.bf16.mxu0 0
    %128 = vmatpush1.bf16.msra.mxu0 %v118
    %129 = vmatprep.subr.bf16.mxu0 0
    %130 = vmatpush1.bf16.msra.mxu0 0
    %131 = vmatprep.subr.bf16.mxu0 0
    %132 = vmatpush1.bf16.msra.mxu0 0
    %133 = vmatprep.subr.bf16.mxu0 0
    %134 = vmatpush1.bf16.msra.mxu0 0
    %135 = vmatprep.subr.bf16.mxu0 0
    %136 = vmatpush1.bf16.msra.mxu0 0
    %137 = vmatprep.subr.bf16.mxu0 0
    %138 = vmatpush1.bf16.msra.mxu0 0
    %139 = vmatprep.subr.bf16.mxu0 0
    %140 = vmatpush1.bf16.msra.mxu0 0
    %141 = vmatprep.subr.bf16.mxu0 0
    %142 = vmatpush1.bf16.msra.mxu0 0
    %143 = vmatprep.subr.bf16.mxu0 0
    %144 = vmatpush1.bf16.msra.mxu0 0
    %145 = vmatprep.subr.bf16.mxu0 0
    %146 = vmatpush1.bf16.msra.mxu0 0
    %147 = vmatprep.subr.bf16.mxu0 0
    %148 = vmatpush1.bf16.msra.mxu0 0
    %149 = vmatprep.subr.bf16.mxu0 0
    %150 = vmatpush1.bf16.msra.mxu0 0
    %151 = vmatprep.subr.bf16.mxu0 0
    %152 = vmatpush1.bf16.msra.mxu0 0
    %153 = vmatprep.subr.bf16.mxu0 0
    %154 = vmatpush1.bf16.msra.mxu0 0
    %155 = vmatprep.subr.bf16.mxu0 0
    %156 = vmatpush1.bf16.msra.mxu0 0
    %157 = vmatprep.mubr.bf16.mxu0 0
    %158 = vmatmul.mubr.bf16.gmra.mrb[0].mxu0 %v123
    %v159 = vpop.f32.mrb[0].mxu0
    %v160 = vadd.f32 0.0, %v159
    %v161 = vpop.f32.mrb[0].mxu0
    %v162 = vpop.f32.mrb[0].mxu0
    %v163 = vpop.f32.mrb[0].mxu0
    %164 = vdwg.mxu0
    %v165 = vld [vmem:[#allocation11] ss:$0 sm:$0xff]
    %v166 = vld [vmem:[#allocation11 + $0x1] ss:$0 sm:$0xff]
    %vm167 = vcmask 523264
    %v168 = vsel %vm167, %v160, 0.0
    %v169 = vrot.slane %v168, 4
    %v170 = vadd.f32 %v168, %v169
    %v171 = vrot.slane %v170, 2
    %v172 = vadd.f32 %v170, %v171
    %v173 = vrot.slane %v172, 1
    %v174 = vadd.f32 %v172, %v173
    %v175 = vmul.f32 %v160, %v160
    %v176 = vsel %vm167, %v175, 0.0
    %v177 = vrot.slane %v176, 4
    %v178 = vadd.f32 %v176, %v177
    %v179 = vrot.slane %v178, 2
    %v180 = vadd.f32 %v178, %v179
    %v181 = vrot.slane %v180, 1
    %v182 = vadd.f32 %v180, %v181
    %v183 = vmul.f32 %v174, 0.125
    %v184 = vmul.f32 %v182, 0.125
    %v185 = vmul.f32 %v183, %v183
    %v186 = vsub.f32 %v184, %v185
    %v187 = vmax.f32 %v186, 0.0
    %v188 = vadd.f32 %v187, 1e-05
    %v189 = vrsqrt.pop %v188
    %v190 = vmul.f32 %v165, %v189
    %v191 = vmul.f32 %v183, %v190
    %v192 = vsub.f32 %v166, %v191
    %v193 = vmul.f32 %v160, %v190
    %v194 = vadd.f32 %v193, %v192
    %v195 = vmax.f32 %v194, 0.0
    %v196 = vpack.c.bf16 %v195, %v195
    %v197 = vld [vmem:[#allocation7] sm:$0xf]
    %v198 = vld [vmem:[#allocation7 + $0x4] sm:$0xf]
    %v199 = vld [vmem:[#allocation7 + $0x8] sm:$0xf]
    %v200 = vld [vmem:[#allocation7 + $0xc] sm:$0xf]
    %v201 = vld [vmem:[#allocation7 + $0x10] sm:$0xf]
    %v202 = vld [vmem:[#allocation7 + $0x14] sm:$0xf]
    %v203 = vld [vmem:[#allocation7 + $0x18] sm:$0xf]
    %v204 = vld [vmem:[#allocation7 + $0x1c] sm:$0xf]
    %v213 = vunpack.c.l.b16 %v197
    %v214 = vunpack.c.l.b16 %v198
    %v215 = vunpack.c.l.b16 %v199
    %v216 = vunpack.c.l.b16 %v200
    %v217 = vunpack.c.l.b16 %v201
    %v218 = vunpack.c.l.b16 %v202
    %v219 = vunpack.c.l.b16 %v203
    %v220 = vunpack.c.l.b16 %v204
    %v221 = vpack.c.b16 %v214, %v213
    %v222 = vpack.c.b16 %v216, %v215
    %v223 = vpack.c.b16 %v218, %v217
    %v224 = vpack.c.b16 %v220, %v219
    %v230 = vsel %vm167, %v196, 0
    %232 = vmatprep.subr.bf16.mxu0 0
    %233 = vmatpush1.bf16.msra.mxu0 %v221
    %234 = vmatprep.subr.bf16.mxu0 0
    %235 = vmatpush1.bf16.msra.mxu0 %v222
    %236 = vmatprep.subr.bf16.mxu0 0
    %237 = vmatpush1.bf16.msra.mxu0 %v223
    %238 = vmatprep.subr.bf16.mxu0 0
    %239 = vmatpush1.bf16.msra.mxu0 %v224
    %240 = vmatprep.subr.bf16.mxu0 0
    %241 = vmatpush1.bf16.msra.mxu0 0
    %242 = vmatprep.subr.bf16.mxu0 0
    %243 = vmatpush1.bf16.msra.mxu0 0
    %244 = vmatprep.subr.bf16.mxu0 0
    %245 = vmatpush1.bf16.msra.mxu0 0
    %246 = vmatprep.subr.bf16.mxu0 0
    %247 = vmatpush1.bf16.msra.mxu0 0
    %248 = vmatprep.subr.bf16.mxu0 0
    %249 = vmatpush1.bf16.msra.mxu0 0
    %250 = vmatprep.subr.bf16.mxu0 0
    %251 = vmatpush1.bf16.msra.mxu0 0
    %252 = vmatprep.subr.bf16.mxu0 0
    %253 = vmatpush1.bf16.msra.mxu0 0
    %254 = vmatprep.subr.bf16.mxu0 0
    %255 = vmatpush1.bf16.msra.mxu0 0
    %256 = vmatprep.subr.bf16.mxu0 0
    %257 = vmatpush1.bf16.msra.mxu0 0
    %258 = vmatprep.subr.bf16.mxu0 0
    %259 = vmatpush1.bf16.msra.mxu0 0
    %260 = vmatprep.subr.bf16.mxu0 0
    %261 = vmatpush1.bf16.msra.mxu0 0
    %262 = vmatprep.subr.bf16.mxu0 0
    %263 = vmatpush1.bf16.msra.mxu0 0
    %264 = vmatprep.mubr.bf16.mxu0 0
    %265 = vmatmul.mubr.bf16.gmra.mrb[0].mxu0 %v230
    %v266 = vpop.f32.mrb[0].mxu0
    %v267 = vadd.f32 0.0, %v266
    %v268 = vpop.f32.mrb[0].mxu0
    %v269 = vpop.f32.mrb[0].mxu0
    %v270 = vpop.f32.mrb[0].mxu0
    %271 = vdwg.mxu0
    %v272 = vld [vmem:[#allocation11 + $0x2] ss:$0 sm:$0xff]
    %v273 = vld [vmem:[#allocation11 + $0x3] ss:$0 sm:$0xff]
    %v274 = vrot.slane %v267, 4
    %v275 = vadd.f32 %v267, %v274
    %v276 = vrot.slane %v275, 2
    %v277 = vadd.f32 %v275, %v276
    %v278 = vrot.slane %v277, 1
    %v279 = vadd.f32 %v277, %v278
    %v280 = vmul.f32 %v267, %v267
    %v281 = vrot.slane %v280, 4
    %v282 = vadd.f32 %v280, %v281
    %v283 = vrot.slane %v282, 2
    %v284 = vadd.f32 %v282, %v283
    %v285 = vrot.slane %v284, 1
    %v286 = vadd.f32 %v284, %v285
    %v287 = vmul.f32 %v279, 0.125
    %v288 = vmul.f32 %v286, 0.125
    %v289 = vmul.f32 %v287, %v287
    %v290 = vsub.f32 %v288, %v289
    %v291 = vmax.f32 %v290, 0.0
    %v292 = vadd.f32 %v291, 1e-05
    %v293 = vrsqrt.pop %v292
    %v294 = vmul.f32 %v272, %v293
    %v295 = vmul.f32 %v287, %v294
    %v296 = vsub.f32 %v273, %v295
    %v297 = vmul.f32 %v267, %v294
    %v298 = vadd.f32 %v297, %v296
    %v299 = vmax.f32 %v298, 0.0
    %v300 = vpack.c.bf16 %v299, %v299
    %v301 = vld [vmem:[#allocation8] sm:$0xff]
    %v302 = vld [vmem:[#allocation8 + $0x8] sm:$0xff]
    %v303 = vld [vmem:[#allocation8 + $0x10] sm:$0xff]
    %v304 = vld [vmem:[#allocation8 + $0x18] sm:$0xff]
    %v305 = vld [vmem:[#allocation8 + $0x20] sm:$0xff]
    %v306 = vld [vmem:[#allocation8 + $0x28] sm:$0xff]
    %v307 = vld [vmem:[#allocation8 + $0x30] sm:$0xff]
    %v308 = vld [vmem:[#allocation8 + $0x38] sm:$0xff]
    %v309 = vld [vmem:[#allocation8 + $0x40] sm:$0xff]
    %v310 = vld [vmem:[#allocation8 + $0x48] sm:$0xff]
    %v311 = vld [vmem:[#allocation8 + $0x50] sm:$0xff]
    %v312 = vld [vmem:[#allocation8 + $0x58] sm:$0xff]
    %v313 = vld [vmem:[#allocation8 + $0x60] sm:$0xff]
    %v314 = vld [vmem:[#allocation8 + $0x68] sm:$0xff]
    %v315 = vld [vmem:[#allocation8 + $0x70] sm:$0xff]
    %v316 = vld [vmem:[#allocation8 + $0x78] sm:$0xff]
    %v333 = vunpack.c.l.b16 %v301
    %v334 = vunpack.c.h.b16 %v301
    %v335 = vunpack.c.l.b16 %v302
    %v336 = vunpack.c.h.b16 %v302
    %v337 = vunpack.c.l.b16 %v303
    %v338 = vunpack.c.h.b16 %v303
    %v339 = vunpack.c.l.b16 %v304
    %v340 = vunpack.c.h.b16 %v304
    %v341 = vunpack.c.l.b16 %v305
    %v342 = vunpack.c.h.b16 %v305
    %v343 = vunpack.c.l.b16 %v306
    %v344 = vunpack.c.h.b16 %v306
    %v345 = vunpack.c.l.b16 %v307
    %v346 = vunpack.c.h.b16 %v307
    %v347 = vunpack.c.l.b16 %v308
    %v348 = vunpack.c.h.b16 %v308
    %v349 = vunpack.c.l.b16 %v309
    %v350 = vunpack.c.h.b16 %v309
    %v351 = vunpack.c.l.b16 %v310
    %v352 = vunpack.c.h.b16 %v310
    %v353 = vunpack.c.l.b16 %v311
    %v354 = vunpack.c.h.b16 %v311
    %v355 = vunpack.c.l.b16 %v312
    %v356 = vunpack.c.h.b16 %v312
    %v357 = vunpack.c.l.b16 %v313
    %v358 = vunpack.c.h.b16 %v313
    %v359 = vunpack.c.l.b16 %v314
    %v360 = vunpack.c.h.b16 %v314
    %v361 = vunpack.c.l.b16 %v315
    %v362 = vunpack.c.h.b16 %v315
    %v363 = vunpack.c.l.b16 %v316
    %v364 = vunpack.c.h.b16 %v316
    %v365 = vpack.c.b16 %v335, %v333
    %v366 = vpack.c.b16 %v336, %v334
    %v367 = vpack.c.b16 %v339, %v337
    %v368 = vpack.c.b16 %v340, %v338
    %v369 = vpack.c.b16 %v343, %v341
    %v370 = vpack.c.b16 %v344, %v342
    %v371 = vpack.c.b16 %v347, %v345
    %v372 = vpack.c.b16 %v348, %v346
    %v373 = vpack.c.b16 %v351, %v349
    %v374 = vpack.c.b16 %v352, %v350
    %v375 = vpack.c.b16 %v355, %v353
    %v376 = vpack.c.b16 %v356, %v354
    %v377 = vpack.c.b16 %v359, %v357
    %v378 = vpack.c.b16 %v360, %v358
    %v379 = vpack.c.b16 %v363, %v361
    %v380 = vpack.c.b16 %v364, %v362
    %397 = vmatprep.subr.bf16.mxu0 %v366
    %398 = vmatpush1.bf16.msra.mxu0 %v365
    %399 = vmatprep.subr.bf16.mxu0 %v368
    %400 = vmatpush1.bf16.msra.mxu0 %v367
    %401 = vmatprep.subr.bf16.mxu0 %v370
    %402 = vmatpush1.bf16.msra.mxu0 %v369
    %403 = vmatprep.subr.bf16.mxu0 %v372
    %404 = vmatpush1.bf16.msra.mxu0 %v371
    %405 = vmatprep.subr.bf16.mxu0 %v374
    %406 = vmatpush1.bf16.msra.mxu0 %v373
    %407 = vmatprep.subr.bf16.mxu0 %v376
    %408 = vmatpush1.bf16.msra.mxu0 %v375
    %409 = vmatprep.subr.bf16.mxu0 %v378
    %410 = vmatpush1.bf16.msra.mxu0 %v377
    %411 = vmatprep.subr.bf16.mxu0 %v380
    %412 = vmatpush1.bf16.msra.mxu0 %v379
    %413 = vmatprep.subr.bf16.mxu0 0
    %414 = vmatpush1.bf16.msra.mxu0 0
    %415 = vmatprep.subr.bf16.mxu0 0
    %416 = vmatpush1.bf16.msra.mxu0 0
    %417 = vmatprep.subr.bf16.mxu0 0
    %418 = vmatpush1.bf16.msra.mxu0 0
    %419 = vmatprep.subr.bf16.mxu0 0
    %420 = vmatpush1.bf16.msra.mxu0 0
    %421 = vmatprep.subr.bf16.mxu0 0
    %422 = vmatpush1.bf16.msra.mxu0 0
    %423 = vmatprep.subr.bf16.mxu0 0
    %424 = vmatpush1.bf16.msra.mxu0 0
    %425 = vmatprep.subr.bf16.mxu0 0
    %426 = vmatpush1.bf16.msra.mxu0 0
    %427 = vmatprep.subr.bf16.mxu0 0
    %428 = vmatpush1.bf16.msra.mxu0 0
    %429 = vmatprep.mubr.bf16.mxu0 0
    %430 = vmatmul.mubr.bf16.gmra.mrb[0].mxu0 %v300
    %v431 = vpop.f32.mrb[0].mxu0
    %v432 = vadd.f32 0.0, %v431
    %v433 = vpop.f32.mrb[0].mxu0
    %v434 = vadd.f32 0.0, %v433
    %v435 = vpop.f32.mrb[0].mxu0
    %v436 = vpop.f32.mrb[0].mxu0
    %437 = vdwg.mxu0
    %s438 = scalar_lea.vmem [#allocation11], 4
    %v439 = vld [vmem:[%s438] ss:$8 sm:$0x3]
    %s440 = scalar_lea.vmem [#allocation11], 5
    %v441 = vld [vmem:[%s440] ss:$8 sm:$0x3]
    %v442 = vrot.slane %v432, 4
    %v443 = vadd.f32 %v432, %v442
    %v444 = vrot.slane %v443, 2
    %v445 = vadd.f32 %v443, %v444
    %v446 = vrot.slane %v445, 1
    %v447 = vadd.f32 %v445, %v446
    %v448 = vrot.slane %v434, 4
    %v449 = vadd.f32 %v434, %v448
    %v450 = vrot.slane %v449, 2
    %v451 = vadd.f32 %v449, %v450
    %v452 = vrot.slane %v451, 1
    %v453 = vadd.f32 %v451, %v452
    %v454 = vmul.f32 %v432, %v432
    %v455 = vmul.f32 %v434, %v434
    %v456 = vrot.slane %v454, 4
    %v457 = vadd.f32 %v454, %v456
    %v458 = vrot.slane %v457, 2
    %v459 = vadd.f32 %v457, %v458
    %v460 = vrot.slane %v459, 1
    %v461 = vadd.f32 %v459, %v460
    %v462 = vrot.slane %v455, 4
    %v463 = vadd.f32 %v455, %v462
    %v464 = vrot.slane %v463, 2
    %v465 = vadd.f32 %v463, %v464
    %v466 = vrot.slane %v465, 1
    %v467 = vadd.f32 %v465, %v466
    %v468 = vmul.f32 %v447, 0.125
    %v469 = vmul.f32 %v453, 0.125
    %v470 = vmul.f32 %v461, 0.125
    %v471 = vmul.f32 %v467, 0.125
    %v472 = vmul.f32 %v468, %v468
    %v473 = vmul.f32 %v469, %v469
    %v474 = vsub.f32 %v470, %v472
    %v475 = vsub.f32 %v471, %v473
    %v476 = vmax.f32 %v474, 0.0
    %v477 = vmax.f32 %v475, 0.0
    %v478 = vadd.f32 %v476, 1e-05
    %v479 = vadd.f32 %v477, 1e-05
    %v480 = vrsqrt.pop %v478
    %v481 = vrsqrt.pop %v479
    %v484 = vcombine.low %v480, %v481
    %v486 = vunpack.c.l.s4 1966171168
    %v487 = vunpack.c.0.s8 %v486
    %v488 = vlaneseq
    %v489 = vshrl.u32 %v488, 7
    %v490 = vsub.s32 %v487, %v489
    %v491 = vrot.slane %v484, %v490
    %v493 = vunpack.c.l.s4 1966171168
    %v494 = vunpack.c.0.s8 %v493
    %v495 = vlaneseq
    %v496 = vshrl.u32 %v495, 7
    %v497 = vsub.s32 %v494, %v496
    %v498 = vrot.slane %v491, %v497
    %v500 = vmul.f32 %v439, %v498
    %v502 = vlaneseq
    %v503 = vshrl.u32 %v502, 7
    %v504 = vsub.s32 0, %v503
    %v505 = vrot.slane %v500, %v504
    %v506 = vlaneseq
    %v507 = vshrl.u32 %v506, 7
    %v508 = vsub.s32 1, %v507
    %v509 = vrot.slane %v500, %v508
    %v512 = vmul.f32 %v468, %v505
    %v513 = vmul.f32 %v469, %v509
    %v516 = vcombine.low %v512, %v513
    %v518 = vunpack.c.l.s4 1966171168
    %v519 = vunpack.c.0.s8 %v518
    %v520 = vlaneseq
    %v521 = vshrl.u32 %v520, 7
    %v522 = vsub.s32 %v519, %v521
    %v523 = vrot.slane %v516, %v522
    %v525 = vunpack.c.l.s4 1966171168
    %v526 = vunpack.c.0.s8 %v525
    %v527 = vlaneseq
    %v528 = vshrl.u32 %v527, 7
    %v529 = vsub.s32 %v526, %v528
    %v530 = vrot.slane %v523, %v529
    %v532 = vsub.f32 %v441, %v530
    %v533 = vmul.f32 %v432, %v505
    %v534 = vmul.f32 %v434, %v509
    %v536 = vlaneseq
    %v537 = vshrl.u32 %v536, 7
    %v538 = vsub.s32 0, %v537
    %v539 = vrot.slane %v532, %v538
    %v540 = vlaneseq
    %v541 = vshrl.u32 %v540, 7
    %v542 = vsub.s32 1, %v541
    %v543 = vrot.slane %v532, %v542
    %v546 = vadd.f32 %v533, %v539
    %v547 = vadd.f32 %v534, %v543
    %v548 = vmax.f32 %v546, 0.0
    %v549 = vmax.f32 %v547, 0.0
    %v550 = vpack.c.bf16 %v548, %v548
    %v551 = vpack.c.bf16 %v549, %v549
    %v552 = vld [vmem:[#allocation10] sm:$0xf]
    %v553 = vld [vmem:[#allocation10 + $0x4] sm:$0xf]
    %v554 = vld [vmem:[#allocation10 + $0x8] sm:$0xf]
    %v555 = vld [vmem:[#allocation10 + $0xc] sm:$0xf]
    %v556 = vld [vmem:[#allocation10 + $0x10] sm:$0xf]
    %v557 = vld [vmem:[#allocation10 + $0x14] sm:$0xf]
    %v558 = vld [vmem:[#allocation10 + $0x18] sm:$0xf]
    %v559 = vld [vmem:[#allocation10 + $0x1c] sm:$0xf]
    %v560 = vld [vmem:[#allocation10 + $0x20] sm:$0xf]
    %v561 = vld [vmem:[#allocation10 + $0x24] sm:$0xf]
    %v562 = vld [vmem:[#allocation10 + $0x28] sm:$0xf]
    %v563 = vld [vmem:[#allocation10 + $0x2c] sm:$0xf]
    %v564 = vld [vmem:[#allocation10 + $0x30] sm:$0xf]
    %v565 = vld [vmem:[#allocation10 + $0x34] sm:$0xf]
    %v566 = vld [vmem:[#allocation10 + $0x38] sm:$0xf]
    %v567 = vld [vmem:[#allocation10 + $0x3c] sm:$0xf]
    %v568 = vld [vmem:[#allocation10 + $0x40] sm:$0xf]
    %v569 = vld [vmem:[#allocation10 + $0x44] sm:$0xf]
    %v570 = vld [vmem:[#allocation10 + $0x48] sm:$0xf]
    %v571 = vld [vmem:[#allocation10 + $0x4c] sm:$0xf]
    %v572 = vld [vmem:[#allocation10 + $0x50] sm:$0xf]
    %v573 = vld [vmem:[#allocation10 + $0x54] sm:$0xf]
    %v574 = vld [vmem:[#allocation10 + $0x58] sm:$0xf]
    %v575 = vld [vmem:[#allocation10 + $0x5c] sm:$0xf]
    %v576 = vld [vmem:[#allocation10 + $0x60] sm:$0xf]
    %v577 = vld [vmem:[#allocation10 + $0x64] sm:$0xf]
    %v578 = vld [vmem:[#allocation10 + $0x68] sm:$0xf]
    %v579 = vld [vmem:[#allocation10 + $0x6c] sm:$0xf]
    %v580 = vld [vmem:[#allocation10 + $0x70] sm:$0xf]
    %v581 = vld [vmem:[#allocation10 + $0x74] sm:$0xf]
    %v582 = vld [vmem:[#allocation10 + $0x78] sm:$0xf]
    %v583 = vld [vmem:[#allocation10 + $0x7c] sm:$0xf]
    %v584 = vld [vmem:[#allocation11 + $0x6] ss:$0 sm:$0xff]
    %v617 = vunpack.c.l.b16 %v552
    %v618 = vunpack.c.l.b16 %v553
    %v619 = vunpack.c.l.b16 %v554
    %v620 = vunpack.c.l.b16 %v555
    %v621 = vunpack.c.l.b16 %v556
    %v622 = vunpack.c.l.b16 %v557
    %v623 = vunpack.c.l.b16 %v558
    %v624 = vunpack.c.l.b16 %v559
    %v625 = vunpack.c.l.b16 %v560
    %v626 = vunpack.c.l.b16 %v561
    %v627 = vunpack.c.l.b16 %v562
    %v628 = vunpack.c.l.b16 %v563
    %v629 = vunpack.c.l.b16 %v564
    %v630 = vunpack.c.l.b16 %v565
    %v631 = vunpack.c.l.b16 %v566
    %v632 = vunpack.c.l.b16 %v567
    %v633 = vunpack.c.l.b16 %v568
    %v634 = vunpack.c.l.b16 %v569
    %v635 = vunpack.c.l.b16 %v570
    %v636 = vunpack.c.l.b16 %v571
    %v637 = vunpack.c.l.b16 %v572
    %v638 = vunpack.c.l.b16 %v573
    %v639 = vunpack.c.l.b16 %v574
    %v640 = vunpack.c.l.b16 %v575
    %v641 = vunpack.c.l.b16 %v576
    %v642 = vunpack.c.l.b16 %v577
    %v643 = vunpack.c.l.b16 %v578
    %v644 = vunpack.c.l.b16 %v579
    %v645 = vunpack.c.l.b16 %v580
    %v646 = vunpack.c.l.b16 %v581
    %v647 = vunpack.c.l.b16 %v582
    %v648 = vunpack.c.l.b16 %v583
    %v649 = vpack.c.b16 %v618, %v617
    %v650 = vpack.c.b16 %v620, %v619
    %v651 = vpack.c.b16 %v622, %v621
    %v652 = vpack.c.b16 %v624, %v623
    %v653 = vpack.c.b16 %v626, %v625
    %v654 = vpack.c.b16 %v628, %v627
    %v655 = vpack.c.b16 %v630, %v629
    %v656 = vpack.c.b16 %v632, %v631
    %v657 = vpack.c.b16 %v634, %v633
    %v658 = vpack.c.b16 %v636, %v635
    %v659 = vpack.c.b16 %v638, %v637
    %v660 = vpack.c.b16 %v640, %v639
    %v661 = vpack.c.b16 %v642, %v641
    %v662 = vpack.c.b16 %v644, %v643
    %v663 = vpack.c.b16 %v646, %v645
    %v664 = vpack.c.b16 %v648, %v647
    %681 = vmatprep.subr.bf16.mxu0 0
    %682 = vmatpush1.bf16.msra.mxu0 %v649
    %683 = vmatprep.subr.bf16.mxu0 0
    %684 = vmatpush1.bf16.msra.mxu0 %v650
    %685 = vmatprep.subr.bf16.mxu0 0
    %686 = vmatpush1.bf16.msra.mxu0 %v651
    %687 = vmatprep.subr.bf16.mxu0 0
    %688 = vmatpush1.bf16.msra.mxu0 %v652
    %689 = vmatprep.subr.bf16.mxu0 0
    %690 = vmatpush1.bf16.msra.mxu0 %v653
    %691 = vmatprep.subr.bf16.mxu0 0
    %692 = vmatpush1.bf16.msra.mxu0 %v654
    %693 = vmatprep.subr.bf16.mxu0 0
    %694 = vmatpush1.bf16.msra.mxu0 %v655
    %695 = vmatprep.subr.bf16.mxu0 0
    %696 = vmatpush1.bf16.msra.mxu0 %v656
    %697 = vmatprep.subr.bf16.mxu0 0
    %698 = vmatpush1.bf16.msra.mxu0 %v657
    %699 = vmatprep.subr.bf16.mxu0 0
    %700 = vmatpush1.bf16.msra.mxu0 %v658
    %701 = vmatprep.subr.bf16.mxu0 0
    %702 = vmatpush1.bf16.msra.mxu0 %v659
    %703 = vmatprep.subr.bf16.mxu0 0
    %704 = vmatpush1.bf16.msra.mxu0 %v660
    %705 = vmatprep.subr.bf16.mxu0 0
    %706 = vmatpush1.bf16.msra.mxu0 %v661
    %707 = vmatprep.subr.bf16.mxu0 0
    %708 = vmatpush1.bf16.msra.mxu0 %v662
    %709 = vmatprep.subr.bf16.mxu0 0
    %710 = vmatpush1.bf16.msra.mxu0 %v663
    %711 = vmatprep.subr.bf16.mxu0 0
    %712 = vmatpush1.bf16.msra.mxu0 %v664
    %713 = vmatprep.mubr.bf16.mxu0 %v551
    %714 = vmatmul.mubr.bf16.gmra.mrb[0].mxu0 %v550
    %v715 = vpop.f32.mrb[0].mxu0
    %v716 = vadd.f32 %v584, %v715
    %v717 = vpop.f32.mrb[0].mxu0
    %v718 = vpop.f32.mrb[0].mxu0
    %v719 = vpop.f32.mrb[0].mxu0
    %720 = vdwg.mxu0
    %v721 = vtanh.pop %v716
    %vm722 = vcmask 130048
    %723 = vst.msk [vmem:[#allocation13] sm:$0xff] %vm722, %v721
    // Predicated region
    $region50: #{model_g_forward.1} parent=1 // pred_check
      _
    $region51: #{model_g_forward.1} parent=1 // pred_check_branch
      %725 = sbr.rel (0) target = $region53
    $region52: #{model_g_forward.1} parent=1 // pred_region
      %s727 = ssub.s32 128, 128
      %728 = vsyncadd [#allocation4], %s727
      %s730 = sshll.u32 [#allocation13], 4
      %s731 = int_to_ptr.vmem [resolvable:$true] %s730
      %733 = dma.vmem_to_hbm [thread:$0]  %s731, 128, %s6, [#allocation4]
    $region53: #{model_g_forward.1} parent=1 // pred_fallthru
      _
    // Predicated region
    $region54: #{model_g_forward.1} parent=1 // pred_check
      _
    $region55: #{model_g_forward.1} parent=1 // pred_check_branch
      %735 = sbr.rel (0) target = $region57
    $region56: #{model_g_forward.1} parent=1 // pred_region
      %736 = dma.done [#allocation4], 128
    $region57: #{model_g_forward.1} parent=1 // pred_fallthru
      _
    %737 = vsyncpa [#allocation3], 1
    %738 = vsyncpa [#allocation6], 1
    %739 = vsyncpa [#allocation9], 1
    %740 = vsyncpa [#allocation12], 1
    %741 = vsyncpa [#allocation4], 1

</llo_original>
